<compile_context>
chip_gen: v6e
topology: v6e:2x2x1
jax: 0.10.0
libtpu: 0.0.40
codegen_flags: <defaults>
</compile_context>

<pallas_src>
import functools

import jax
import jax.numpy as jnp
from jax.experimental import pallas as pl
from jax.experimental.pallas import tpu as pltpu


def _rnn_kernel(x_ref, wx_ref, bxh_ref, wh_ref, wo_ref, bo_ref, out_ref,
                xproj_ref, h_ref, *, compute_dtype):
    """One (batch-tile, time-chunk) grid step.

    x_ref:     (Tc*bb, I)  time-major rows of this batch tile / time chunk
    wx_ref:    (I, H)      bxh_ref: (1, H)  (bx + bh folded into one bias)
    wh_ref:    (H, H)      wo_ref:  (H, O)  bo_ref: (1, O) (pad lanes = -1e30)
    out_ref:   (bb, O)     written only on the last time chunk
    xproj_ref: (Tc*bb, H)  f32 VMEM scratch (hoisted input projection)
    h_ref:     (bb, H)     f32 VMEM scratch carrying h across time chunks
    """
    tc = pl.program_id(1)
    bb = out_ref.shape[0]
    t_chunk = x_ref.shape[0] // bb

    # (1) Hoisted input projection for the whole chunk: ONE matmul (bf16
    #     operands, f32 accumulate), both biases folded in once.
    xproj_ref[...] = (
        jnp.dot(x_ref[...], wx_ref[...], preferred_element_type=jnp.float32)
        + bxh_ref[...]
    )

    # (2) h0 == 0: reset the carried hidden state at the first time chunk.
    @pl.when(tc == 0)
    def _():
        h_ref[...] = jnp.zeros_like(h_ref)

    # (3) Serial recurrence over this chunk: one MXU matmul + one EUP tanh on
    #     the critical path per step; xproj slices are static and
    #     sublane-aligned.  Chunk is small, so full unroll keeps the
    #     matmul->tanh chain visible to the LLO scheduler without code bloat.
    # TODO(synk): for H <= 256, keep Wh resident in the MXU weight registers
    #             across the loop via pltpu.matmul_push_rhs/acc_lhs/pop.
    h = h_ref[...]
    for t in range(t_chunk):
        hw = jnp.dot(h.astype(compute_dtype), wh_ref[...],
                     preferred_element_type=jnp.float32)
        h = jnp.tanh(hw + xproj_ref[t * bb:(t + 1) * bb, :])
    h_ref[...] = h

    # (4) Output projection + numerically stable log-softmax on the last
    #     chunk only.  Padded logit lanes carry a -1e30 bias -> exp == 0.
    @pl.when(tc == pl.num_programs(1) - 1)
    def _():
        logits = (jnp.dot(h.astype(compute_dtype), wo_ref[...],
                          preferred_element_type=jnp.float32) + bo_ref[...])
        m = jnp.max(logits, axis=-1, keepdims=True)
        shifted = logits - m
        out_ref[...] = shifted - jnp.log(
            jnp.sum(jnp.exp(shifted), axis=-1, keepdims=True))


def _round_up(x, m):
    return ((x + m - 1) // m) * m


def _pick_chunk(total, max_chunk):
    c = min(total, max_chunk)
    while total % c:
        c -= 1
    return c


def rnn_forward(x_bct, wx, bx, wh, bh, wo, bo, *, use_bf16_matmul=True,
                max_t_chunk=8):
    """x_bct: (B, input_size, T) f32 (PyTorch layout). Returns (B, output_size) f32."""
    B, I, T = x_bct.shape
    H = wx.shape[1]
    O = wo.shape[1]
    compute_dtype = jnp.bfloat16 if use_bf16_matmul else jnp.float32
    f32 = jnp.float32

    # Lane/sublane-dense padded sizes.
    B_pad = _round_up(B, 8)        # sublane multiple
    H_pad = _round_up(H, 128)      # lane / MXU multiple
    O_pad = _round_up(O, 128)      # lane-dense output -> unmasked stores

    # Batch tiling ("parallel" grid axis -> 2nd TensorCore on v7x, scales B).
    if B_pad <= 128:
        bb = B_pad
    else:
        B_pad = _round_up(B_pad, 128)
        bb = 128
    n_g = B_pad // bb

    # Time chunking ("arbitrary" axis): bounds the resident xproj scratch and
    # pipelines the next x chunk's DMA under the current chunk's recurrence.
    t_chunk = _pick_chunk(T, max_t_chunk)
    n_tc = T // t_chunk

    # Layout plumbing (plain XLA): (B,I,T) -> (T,B,I) -> pad batch ->
    # (n_g, T*bb, I) with rows time-major inside each batch tile.
    x_tbi = jnp.transpose(x_bct, (2, 0, 1)).astype(f32)
    x_tbi = jnp.pad(x_tbi, ((0, 0), (0, B_pad - B), (0, 0)))
    x_g = (x_tbi.reshape(T, n_g, bb, I)
                 .transpose(1, 0, 2, 3)
                 .reshape(n_g, T * bb, I)
                 .astype(compute_dtype))

    # Pad weights (pre-transposed: x @ W + b).  Matmul operands in compute
    # dtype; biases stay f32 (added after the f32 accumulate).
    wx_p = jnp.pad(wx.astype(f32), ((0, 0), (0, H_pad - H))).astype(compute_dtype)
    wh_p = jnp.pad(wh.astype(f32), ((0, H_pad - H), (0, H_pad - H))).astype(compute_dtype)
    wo_p = jnp.pad(wo.astype(f32), ((0, H_pad - H), (0, O_pad - O))).astype(compute_dtype)
    bxh_p = jnp.pad((bx + bh).astype(f32), ((0, 0), (0, H_pad - H)))
    bo_p = jnp.pad(bo.astype(f32), ((0, 0), (0, O_pad - O)), constant_values=-1e30)

    itemsize = jnp.dtype(compute_dtype).itemsize
    cost = pl.CostEstimate(
        flops=2 * T * B_pad * (I * H_pad + H_pad * H_pad)
              + 2 * B_pad * H_pad * O_pad,
        transcendentals=T * B_pad * H_pad + B_pad * O_pad,
        bytes_accessed=(x_g.size * itemsize
                        + (wx_p.size + wh_p.size + wo_p.size) * itemsize
                        + (bxh_p.size + bo_p.size) * 4
                        + B_pad * O_pad * 4),
    )

    # Explicit VMEM budget (v7x: 64 MiB physical, 32 MiB default scoped).
    vmem_est = (2 * t_chunk * bb * I * itemsize                 # x chunk (double-buffered)
                + (I * H_pad + H_pad * H_pad + H_pad * O_pad) * itemsize  # weights
                + (H_pad + O_pad) * 4                           # biases
                + t_chunk * bb * H_pad * 4                      # xproj scratch
                + bb * H_pad * 4                                # h scratch
                + 2 * bb * O_pad * 4)                           # output block
    vmem_limit = int(min(max(2 * vmem_est, 32 * 1024 * 1024), 64 * 1024 * 1024))

    kernel = functools.partial(_rnn_kernel, compute_dtype=compute_dtype)

    out = pl.pallas_call(
        kernel,
        out_shape=jax.ShapeDtypeStruct((B_pad, O_pad), jnp.float32),
        grid_spec=pltpu.PrefetchScalarGridSpec(
            num_scalar_prefetch=0,
            grid=(n_g, n_tc),
            in_specs=[
                pl.BlockSpec((None, t_chunk * bb, I), lambda g, t: (g, t, 0)),
                pl.BlockSpec((I, H_pad), lambda g, t: (0, 0)),
                pl.BlockSpec((1, H_pad), lambda g, t: (0, 0)),
                pl.BlockSpec((H_pad, H_pad), lambda g, t: (0, 0)),
                pl.BlockSpec((H_pad, O_pad), lambda g, t: (0, 0)),
                pl.BlockSpec((1, O_pad), lambda g, t: (0, 0)),
            ],
            out_specs=pl.BlockSpec((bb, O_pad), lambda g, t: (g, 0)),
            scratch_shapes=[
                pltpu.VMEM((t_chunk * bb, H_pad), jnp.float32),  # xproj chunk
                pltpu.VMEM((bb, H_pad), jnp.float32),            # carried h
            ],
        ),
        compiler_params=pltpu.CompilerParams(
            dimension_semantics=("parallel", "arbitrary"),
            vmem_limit_bytes=vmem_limit,
        ),
        cost_estimate=cost,
    )(x_g, wx_p, bxh_p, wh_p, wo_p, bo_p)

    return out[:B, :O]


def init_params(key, input_size, hidden_size, output_size):
    """Deterministic nn.Linear-style init (uniform +-1/sqrt(fan_in)).
    Weights stored pre-transposed: (fan_in, fan_out)."""
    ks = jax.random.split(key, 6)

    def linear(kw, kb, fan_in, fan_out):
        bound = 1.0 / jnp.sqrt(fan_in)
        w = jax.random.uniform(kw, (fan_in, fan_out), jnp.float32, -bound, bound)
        b = jax.random.uniform(kb, (1, fan_out), jnp.float32, -bound, bound)
        return w, b

    wx, bx = linear(ks[0], ks[1], input_size, hidden_size)
    wh, bh = linear(ks[2], ks[3], hidden_size, hidden_size)
    wo, bo = linear(ks[4], ks[5], hidden_size, output_size)
    return wx, bx, wh, bh, wo, bo


def _reference_forward(x_bct, wx, bx, wh, bh, wo, bo):
    """Pure-JAX mirror of the PyTorch module's forward (correctness check)."""
    B, I, T = x_bct.shape
    H = wx.shape[1]
    h = jnp.zeros((B, H), jnp.float32)
    for t in range(T):
        xt = x_bct[:, :, t]
        h = jnp.tanh(h @ wh + bh + xt @ wx + bx)
    logits = h @ wo + bo
    return jax.nn.log_softmax(logits, axis=1)


if __name__ == "__main__":
    B = 2
    input_size = 4
    hidden_size = 32
    output_size = 8
    T = 16

    key = jax.random.PRNGKey(0)
    k_x, k_p = jax.random.split(key)
    x = jax.random.normal(k_x, (B, input_size, T), dtype=jnp.float32)
    params = init_params(k_p, input_size, hidden_size, output_size)

    ref = _reference_forward(x, *params)

    # f32-operand path: exact parity with the PyTorch-equivalent reference.
    out_f32 = jax.block_until_ready(rnn_forward(x, *params, use_bf16_matmul=False))
    assert out_f32.shape == (B, output_size)
    assert jnp.allclose(jnp.sum(jnp.exp(out_f32), axis=1), 1.0, atol=1e-4)
    assert jnp.allclose(out_f32, ref, atol=1e-4, rtol=1e-4)

    # Default bf16-operand path (MXU-native); accumulation stays f32.
    out = jax.block_until_ready(rnn_forward(x, *params))
    assert out.shape == (B, output_size)
    assert jnp.allclose(jnp.sum(jnp.exp(out), axis=1), 1.0, atol=1e-3)
    assert jnp.allclose(out, ref, atol=5e-2, rtol=5e-2)

    print("KERNEL_OK")
</pallas_src>

<mosaic_0001>
module attributes {stable_mosaic.version = 11 : i64} {
  func.func @_rnn_kernel(%arg0: i32, %arg1: i32, %arg2: memref<1x64x4xf32, #tpu.memory_space<vmem>>, %arg3: memref<4x128xf32, #tpu.memory_space<vmem>>, %arg4: memref<1x128xf32, #tpu.memory_space<vmem>>, %arg5: memref<128x128xf32, #tpu.memory_space<vmem>>, %arg6: memref<128x128xf32, #tpu.memory_space<vmem>>, %arg7: memref<1x128xf32, #tpu.memory_space<vmem>>, %arg8: memref<8x128xf32, #tpu.memory_space<vmem>>, %arg9: memref<64x128xf32, #tpu.memory_space<vmem>>, %arg10: memref<8x128xf32, #tpu.memory_space<vmem>>) attributes {dimension_semantics = [#tpu.dimension_semantics<parallel>, #tpu.dimension_semantics<arbitrary>], iteration_bounds = array<i64: 1, 2>, scalar_prefetch = 0 : i64, scratch_operands = 2 : i64, tpu.core_type = #tpu.core_type<tc>, window_params = [{transform_indices = @transform_0, window_bounds = array<i64: 1, 64, 4>}, {pipeline_mode = #tpu.pipeline_mode<synchronous>, transform_indices = @transform_1, window_bounds = array<i64: 4, 128>}, {pipeline_mode = #tpu.pipeline_mode<synchronous>, transform_indices = @transform_2, window_bounds = array<i64: 1, 128>}, {pipeline_mode = #tpu.pipeline_mode<synchronous>, transform_indices = @transform_3, window_bounds = array<i64: 128, 128>}, {pipeline_mode = #tpu.pipeline_mode<synchronous>, transform_indices = @transform_4, window_bounds = array<i64: 128, 128>}, {pipeline_mode = #tpu.pipeline_mode<synchronous>, transform_indices = @transform_5, window_bounds = array<i64: 1, 128>}, {transform_indices = @transform_6, window_bounds = array<i64: 8, 128>}]} {
    %c0 = arith.constant 0 : index
    %c0_0 = arith.constant 0 : index
    %c0_1 = arith.constant 0 : index
    %0 = vector.load %arg2[%c0, %c0_0, %c0_1] : memref<1x64x4xf32, #tpu.memory_space<vmem>>, vector<1x64x4xf32>
    %1 = vector.shape_cast %0 : vector<1x64x4xf32> to vector<64x4xf32>
    %c0_2 = arith.constant 0 : index
    %c0_3 = arith.constant 0 : index
    %2 = vector.load %arg3[%c0_2, %c0_3] : memref<4x128xf32, #tpu.memory_space<vmem>>, vector<4x128xf32>
    %cst = arith.constant dense<0.000000e+00> : vector<64x128xf32>
    %3 = tpu.matmul %1, %2, %cst {dimension_numbers = #tpu.dot_dimension_numbers<[1], [0], [0], [1], [0, 0, 1, 1], [], []>} : vector<64x4xf32>, vector<4x128xf32>, vector<64x128xf32> -> vector<64x128xf32>
    %c0_4 = arith.constant 0 : index
    %c0_5 = arith.constant 0 : index
    %4 = vector.load %arg4[%c0_4, %c0_5] : memref<1x128xf32, #tpu.memory_space<vmem>>, vector<1x128xf32>
    %5 = vector.broadcast %4 : vector<1x128xf32> to vector<64x128xf32>
    %6 = arith.addf %3, %5 : vector<64x128xf32>
    %c0_6 = arith.constant 0 : index
    %c0_7 = arith.constant 0 : index
    %7 = vector.load %arg9[%c0_6, %c0_7] : memref<64x128xf32, #tpu.memory_space<vmem>>, vector<64x128xf32>
    tpu.vector_store %arg9[%c0_6, %c0_7], %6 {strides = array<i32>} : memref<64x128xf32, #tpu.memory_space<vmem>>, vector<64x128xf32>,
    %c0_i32 = arith.constant 0 : i32
    %8 = arith.cmpi eq, %arg1, %c0_i32 : i32
    %9 = arith.extui %8 : i1 to i32
    %c0_i32_8 = arith.constant 0 : i32
    %10 = arith.cmpi ne, %9, %c0_i32_8 : i32
    scf.if %10 {
      %cst_47 = arith.constant 0.000000e+00 : f32
      %56 = vector.broadcast %cst_47 : f32 to vector<8x128xf32>
      %c0_48 = arith.constant 0 : index
      %c0_49 = arith.constant 0 : index
      %57 = vector.load %arg10[%c0_48, %c0_49] : memref<8x128xf32, #tpu.memory_space<vmem>>, vector<8x128xf32>
      tpu.vector_store %arg10[%c0_48, %c0_49], %56 {strides = array<i32>} : memref<8x128xf32, #tpu.memory_space<vmem>>, vector<8x128xf32>,
    } else {
    }
    %c0_9 = arith.constant 0 : index
    %c0_10 = arith.constant 0 : index
    %11 = vector.load %arg10[%c0_9, %c0_10] : memref<8x128xf32, #tpu.memory_space<vmem>>, vector<8x128xf32>
    %c0_11 = arith.constant 0 : index
    %c0_12 = arith.constant 0 : index
    %12 = vector.load %arg5[%c0_11, %c0_12] : memref<128x128xf32, #tpu.memory_space<vmem>>, vector<128x128xf32>
    %cst_13 = arith.constant dense<0.000000e+00> : vector<8x128xf32>
    %13 = tpu.matmul %11, %12, %cst_13 {dimension_numbers = #tpu.dot_dimension_numbers<[1], [0], [0], [1], [0, 0, 1, 1], [], []>} : vector<8x128xf32>, vector<128x128xf32>, vector<8x128xf32> -> vector<8x128xf32>
    %c0_14 = arith.constant 0 : index
    %c0_15 = arith.constant 0 : index
    %14 = vector.load %arg9[%c0_14, %c0_15] : memref<64x128xf32, #tpu.memory_space<vmem>>, vector<8x128xf32>
    %15 = arith.addf %13, %14 : vector<8x128xf32>
    %16 = math.tanh %15 : vector<8x128xf32>
    %c0_16 = arith.constant 0 : index
    %c0_17 = arith.constant 0 : index
    %17 = vector.load %arg5[%c0_16, %c0_17] : memref<128x128xf32, #tpu.memory_space<vmem>>, vector<128x128xf32>
    %cst_18 = arith.constant dense<0.000000e+00> : vector<8x128xf32>
    %18 = tpu.matmul %16, %17, %cst_18 {dimension_numbers = #tpu.dot_dimension_numbers<[1], [0], [0], [1], [0, 0, 1, 1], [], []>} : vector<8x128xf32>, vector<128x128xf32>, vector<8x128xf32> -> vector<8x128xf32>
    %c8 = arith.constant 8 : index
    %c0_19 = arith.constant 0 : index
    %19 = vector.load %arg9[%c8, %c0_19] : memref<64x128xf32, #tpu.memory_space<vmem>>, vector<8x128xf32>
    %20 = arith.addf %18, %19 : vector<8x128xf32>
    %21 = math.tanh %20 : vector<8x128xf32>
    %c0_20 = arith.constant 0 : index
    %c0_21 = arith.constant 0 : index
    %22 = vector.load %arg5[%c0_20, %c0_21] : memref<128x128xf32, #tpu.memory_space<vmem>>, vector<128x128xf32>
    %cst_22 = arith.constant dense<0.000000e+00> : vector<8x128xf32>
    %23 = tpu.matmul %21, %22, %cst_22 {dimension_numbers = #tpu.dot_dimension_numbers<[1], [0], [0], [1], [0, 0, 1, 1], [], []>} : vector<8x128xf32>, vector<128x128xf32>, vector<8x128xf32> -> vector<8x128xf32>
    %c16 = arith.constant 16 : index
    %c0_23 = arith.constant 0 : index
    %24 = vector.load %arg9[%c16, %c0_23] : memref<64x128xf32, #tpu.memory_space<vmem>>, vector<8x128xf32>
    %25 = arith.addf %23, %24 : vector<8x128xf32>
    %26 = math.tanh %25 : vector<8x128xf32>
    %c0_24 = arith.constant 0 : index
    %c0_25 = arith.constant 0 : index
    %27 = vector.load %arg5[%c0_24, %c0_25] : memref<128x128xf32, #tpu.memory_space<vmem>>, vector<128x128xf32>
    %cst_26 = arith.constant dense<0.000000e+00> : vector<8x128xf32>
    %28 = tpu.matmul %26, %27, %cst_26 {dimension_numbers = #tpu.dot_dimension_numbers<[1], [0], [0], [1], [0, 0, 1, 1], [], []>} : vector<8x128xf32>, vector<128x128xf32>, vector<8x128xf32> -> vector<8x128xf32>
    %c24 = arith.constant 24 : index
    %c0_27 = arith.constant 0 : index
    %29 = vector.load %arg9[%c24, %c0_27] : memref<64x128xf32, #tpu.memory_space<vmem>>, vector<8x128xf32>
    %30 = arith.addf %28, %29 : vector<8x128xf32>
    %31 = math.tanh %30 : vector<8x128xf32>
    %c0_28 = arith.constant 0 : index
    %c0_29 = arith.constant 0 : index
    %32 = vector.load %arg5[%c0_28, %c0_29] : memref<128x128xf32, #tpu.memory_space<vmem>>, vector<128x128xf32>
    %cst_30 = arith.constant dense<0.000000e+00> : vector<8x128xf32>
    %33 = tpu.matmul %31, %32, %cst_30 {dimension_numbers = #tpu.dot_dimension_numbers<[1], [0], [0], [1], [0, 0, 1, 1], [], []>} : vector<8x128xf32>, vector<128x128xf32>, vector<8x128xf32> -> vector<8x128xf32>
    %c32 = arith.constant 32 : index
    %c0_31 = arith.constant 0 : index
    %34 = vector.load %arg9[%c32, %c0_31] : memref<64x128xf32, #tpu.memory_space<vmem>>, vector<8x128xf32>
    %35 = arith.addf %33, %34 : vector<8x128xf32>
    %36 = math.tanh %35 : vector<8x128xf32>
    %c0_32 = arith.constant 0 : index
    %c0_33 = arith.constant 0 : index
    %37 = vector.load %arg5[%c0_32, %c0_33] : memref<128x128xf32, #tpu.memory_space<vmem>>, vector<128x128xf32>
    %cst_34 = arith.constant dense<0.000000e+00> : vector<8x128xf32>
    %38 = tpu.matmul %36, %37, %cst_34 {dimension_numbers = #tpu.dot_dimension_numbers<[1], [0], [0], [1], [0, 0, 1, 1], [], []>} : vector<8x128xf32>, vector<128x128xf32>, vector<8x128xf32> -> vector<8x128xf32>
    %c40 = arith.constant 40 : index
    %c0_35 = arith.constant 0 : index
    %39 = vector.load %arg9[%c40, %c0_35] : memref<64x128xf32, #tpu.memory_space<vmem>>, vector<8x128xf32>
    %40 = arith.addf %38, %39 : vector<8x128xf32>
    %41 = math.tanh %40 : vector<8x128xf32>
    %c0_36 = arith.constant 0 : index
    %c0_37 = arith.constant 0 : index
    %42 = vector.load %arg5[%c0_36, %c0_37] : memref<128x128xf32, #tpu.memory_space<vmem>>, vector<128x128xf32>
    %cst_38 = arith.constant dense<0.000000e+00> : vector<8x128xf32>
    %43 = tpu.matmul %41, %42, %cst_38 {dimension_numbers = #tpu.dot_dimension_numbers<[1], [0], [0], [1], [0, 0, 1, 1], [], []>} : vector<8x128xf32>, vector<128x128xf32>, vector<8x128xf32> -> vector<8x128xf32>
    %c48 = arith.constant 48 : index
    %c0_39 = arith.constant 0 : index
    %44 = vector.load %arg9[%c48, %c0_39] : memref<64x128xf32, #tpu.memory_space<vmem>>, vector<8x128xf32>
    %45 = arith.addf %43, %44 : vector<8x128xf32>
    %46 = math.tanh %45 : vector<8x128xf32>
    %c0_40 = arith.constant 0 : index
    %c0_41 = arith.constant 0 : index
    %47 = vector.load %arg5[%c0_40, %c0_41] : memref<128x128xf32, #tpu.memory_space<vmem>>, vector<128x128xf32>
    %cst_42 = arith.constant dense<0.000000e+00> : vector<8x128xf32>
    %48 = tpu.matmul %46, %47, %cst_42 {dimension_numbers = #tpu.dot_dimension_numbers<[1], [0], [0], [1], [0, 0, 1, 1], [], []>} : vector<8x128xf32>, vector<128x128xf32>, vector<8x128xf32> -> vector<8x128xf32>
    %c56 = arith.constant 56 : index
    %c0_43 = arith.constant 0 : index
    %49 = vector.load %arg9[%c56, %c0_43] : memref<64x128xf32, #tpu.memory_space<vmem>>, vector<8x128xf32>
    %50 = arith.addf %48, %49 : vector<8x128xf32>
    %51 = math.tanh %50 : vector<8x128xf32>
    %c0_44 = arith.constant 0 : index
    %c0_45 = arith.constant 0 : index
    %52 = vector.load %arg10[%c0_44, %c0_45] : memref<8x128xf32, #tpu.memory_space<vmem>>, vector<8x128xf32>
    tpu.vector_store %arg10[%c0_44, %c0_45], %51 {strides = array<i32>} : memref<8x128xf32, #tpu.memory_space<vmem>>, vector<8x128xf32>,
    %c1_i32 = arith.constant 1 : i32
    %53 = arith.cmpi eq, %arg1, %c1_i32 : i32
    %54 = arith.extui %53 : i1 to i32
    %c0_i32_46 = arith.constant 0 : i32
    %55 = arith.cmpi ne, %54, %c0_i32_46 : i32
    scf.if %55 {
      %c0_47 = arith.constant 0 : index
      %c0_48 = arith.constant 0 : index
      %56 = vector.load %arg6[%c0_47, %c0_48] : memref<128x128xf32, #tpu.memory_space<vmem>>, vector<128x128xf32>
      %cst_49 = arith.constant dense<0.000000e+00> : vector<8x128xf32>
      %57 = tpu.matmul %51, %56, %cst_49 {dimension_numbers = #tpu.dot_dimension_numbers<[1], [0], [0], [1], [0, 0, 1, 1], [], []>} : vector<8x128xf32>, vector<128x128xf32>, vector<8x128xf32> -> vector<8x128xf32>
      %c0_50 = arith.constant 0 : index
      %c0_51 = arith.constant 0 : index
      %58 = vector.load %arg7[%c0_50, %c0_51] : memref<1x128xf32, #tpu.memory_space<vmem>>, vector<1x128xf32>
      %59 = vector.broadcast %58 : vector<1x128xf32> to vector<8x128xf32>
      %60 = arith.addf %57, %59 : vector<8x128xf32>
      %cst_52 = arith.constant dense<0xFF800000> : vector<8xf32>
      %61 = vector.multi_reduction <maximumf>, %60, %cst_52 [1] : vector<8x128xf32> to vector<8xf32>
      %62 = vector.shape_cast %61 : vector<8xf32> to vector<8x1xf32>
      %63 = vector.broadcast %62 : vector<8x1xf32> to vector<8x128xf32>
      %64 = arith.subf %60, %63 : vector<8x128xf32>
      %65 = math.exp %64 : vector<8x128xf32>
      %cst_53 = arith.constant dense<0.000000e+00> : vector<8xf32>
      %66 = vector.multi_reduction <add>, %65, %cst_53 [1] : vector<8x128xf32> to vector<8xf32>
      %67 = vector.shape_cast %66 : vector<8xf32> to vector<8x1xf32>
      %68 = math.log %67 : vector<8x1xf32>
      %69 = vector.broadcast %68 : vector<8x1xf32> to vector<8x128xf32>
      %70 = arith.subf %64, %69 : vector<8x128xf32>
      %c0_54 = arith.constant 0 : index
      %c0_55 = arith.constant 0 : index
      %71 = vector.load %arg8[%c0_54, %c0_55] : memref<8x128xf32, #tpu.memory_space<vmem>>, vector<8x128xf32>
      tpu.vector_store %arg8[%c0_54, %c0_55], %70 {strides = array<i32>} : memref<8x128xf32, #tpu.memory_space<vmem>>, vector<8x128xf32>,
    } else {
    }
    return
  }
  func.func @transform_0(%arg0: i32, %arg1: i32) -> (i32, i32, i32) {
    %c0_i32 = arith.constant 0 : i32
    %c0_i32_0 = arith.constant 0 : i32
    return %arg0, %arg1, %c0_i32 : i32, i32, i32
  }
  func.func @transform_1(%arg0: i32, %arg1: i32) -> (i32, i32) {
    %c0_i32 = arith.constant 0 : i32
    %c0_i32_0 = arith.constant 0 : i32
    %c0_i32_1 = arith.constant 0 : i32
    return %c0_i32, %c0_i32_0 : i32, i32
  }
  func.func @transform_2(%arg0: i32, %arg1: i32) -> (i32, i32) {
    %c0_i32 = arith.constant 0 : i32
    %c0_i32_0 = arith.constant 0 : i32
    %c0_i32_1 = arith.constant 0 : i32
    return %c0_i32, %c0_i32_0 : i32, i32
  }
  func.func @transform_3(%arg0: i32, %arg1: i32) -> (i32, i32) {
    %c0_i32 = arith.constant 0 : i32
    %c0_i32_0 = arith.constant 0 : i32
    %c0_i32_1 = arith.constant 0 : i32
    return %c0_i32, %c0_i32_0 : i32, i32
  }
  func.func @transform_4(%arg0: i32, %arg1: i32) -> (i32, i32) {
    %c0_i32 = arith.constant 0 : i32
    %c0_i32_0 = arith.constant 0 : i32
    %c0_i32_1 = arith.constant 0 : i32
    return %c0_i32, %c0_i32_0 : i32, i32
  }
  func.func @transform_5(%arg0: i32, %arg1: i32) -> (i32, i32) {
    %c0_i32 = arith.constant 0 : i32
    %c0_i32_0 = arith.constant 0 : i32
    %c0_i32_1 = arith.constant 0 : i32
    return %c0_i32, %c0_i32_0 : i32, i32
  }
  func.func @transform_6(%arg0: i32, %arg1: i32) -> (i32, i32) {
    %c0_i32 = arith.constant 0 : i32
    %c0_i32_0 = arith.constant 0 : i32
    return %arg0, %c0_i32 : i32, i32
  }
}

</mosaic_0001>

<llo_original>
// kernel: tpu_custom_call.1
$region0: #{tpu_custom_call.1}
  #allocation0 [shape = 'u32[]', space=smem, size = 0x4, offset = 0x4, fixed_abs, tag = 'smem constant byte address 0x4 - core index']
  #allocation1 [shape = 'u32[144,128]{1,0:T(1,128)}', space=vmem, size = 0x12000, scoped, tag = 'internal scratch']
  #allocation2 [shape = 'f32[64,128]{1,0:T(8,128)}', space=vmem, size = 0x8000, scoped, tag = 'scratch operand']
  #allocation3 [shape = 'f32[8,128]{1,0:T(8,128)}', space=vmem, size = 0x1000, scoped, tag = 'scratch operand']
  %s0 = inlined_call_operand.vmem [shape: f32[1,128,4], index: 0, kind: input, shape index: {}]
  %s1 = inlined_call_operand.vmem [shape: f32[4,128], index: 1, kind: input, shape index: {}]
  %s2 = inlined_call_operand.vmem [shape: f32[1,128], index: 2, kind: input, shape index: {}]
  %s3 = inlined_call_operand.vmem [shape: f32[128,128], index: 3, kind: input, shape index: {}]
  %s4 = inlined_call_operand.hbm [shape: f32[128,128], index: 4, kind: input, shape index: {}]
  %s5 = inlined_call_operand.vmem [shape: f32[1,128], index: 5, kind: input, shape index: {}]
  %s6 = inlined_call_operand.hbm [shape: f32[8,128], index: 6, kind: output, shape index: {}]
  %s7 = sld [smem:[#allocation0]]
  $region69: #{tpu_custom_call.1} parent=0
    _
  %s9 = ssub.s32 1, %s7
  %s10 = scalar_select 0, %s9, %s7
  $region1: #{tpu_custom_call.1} parent=0
    #allocation4 [shape = 'u8[65536]{0}', space=vmem, size = 0x10000, scoped, tag = 'input window, operand 4, single buffered']
    #allocation5 [shape = 's32[2]{0}', space=sflag, size = 0x8, scoped, tag = 'scoped memory for tpu_custom_call.1']
    #allocation6 [shape = 's32[2]{0}', space=sflag, size = 0x8, scoped, tag = 'scoped memory for tpu_custom_call.1']
    #allocation7 [shape = 'u8[4096]{0}', space=vmem, size = 0x1000, scoped, tag = 'output window, operand 0, single buffered']
    %11 = vsyncpa [#allocation5], 0
    %12 = vsyncpa [#allocation6], 0
    loop: start=0, step=1, limit=4
    $region2: #{tpu_custom_call.1} parent=1 // loop_pre_header
      _
    $region3: #{tpu_custom_call.1} parent=1 // loop_header
      %s14 = sphi 0, %s18
      %p15 = scmp.ge.s32.totalorder %s14, 4
      %s21 = sphi 0, %s33
      %s22 = sphi 0, %s29
      %s23 = sphi 0, %s21
      %s24 = sphi 0, %s22
      %s25 = sphi 0, %s23
      %s26 = sphi 0, %s24
      %s38 = sphi 0, %s40
      %s41 = sphi 0, %s38
      %s42 = sphi 0, %s41
      %s58 = sphi 0, %s42
      %s62 = sphi 0, %s62
      %s64 = sphi 0, %s62
      %s65 = sphi 0, %s64
      %s79 = sphi 0, %s65
      %s83 = sphi 0, %s83
      %s85 = sphi 0, %s83
      %s86 = sphi 0, %s85
      %s100 = sphi 0, %s86
      %s104 = sphi 0, %s104
      %s106 = sphi 0, %s104
      %s107 = sphi 0, %s106
      %s121 = sphi 0, %s107
      %s125 = sphi 0, %s125
      %s127 = sphi 0, %s125
      %s128 = sphi 0, %s127
      %s142 = sphi 0, %s128
      %s146 = sphi 0, %s146
      %s148 = sphi 0, %s146
      %s149 = sphi 0, %s148
      %s163 = sphi 0, %s149
      %s169 = sphi 0, %s171
      %s172 = sphi 0, %s169
      %s173 = sphi 0, %s172
      %s189 = sphi 0, %s173
    $region4: #{tpu_custom_call.1} parent=1 // loop_header_branch
      %17 = sbr.rel (%p15) target = $region8
    $region5: #{tpu_custom_call.1} parent=1 // loop_body
      %s19 = ssub.s32 %s14, 1
      %s20 = ssub.s32 %s14, 2
      %s27 = sadd.s32 1, %s22
      %p28 = scmp.ge.s32.totalorder %s27, 2
      %s29 = scalar_select %p28, 0, %s27
      %s30 = sadd.s32 1, %s21
      %s31 = scalar_select %p28, %s30, %s21
      %p32 = scmp.ge.s32.totalorder %s31, 1
      %s33 = scalar_select %p32, 0, %s31
      %s34 = ssub.s32 %s21, %s33
      %s35 = ssub.s32 %s22, %s29
      %s36 = sor.u32 %s34, %s35
      %p37 = scmp.eq.s32.totalorder %s36, 0
      %s39 = sadd.s32 %s38, 1
      %s40 = scalar_select %p37, %s38, %s39
      %p43 = pneg %p37
      %p44 = scmp.eq.s32.totalorder %s14, 1
      %p45 = por %p43, %p44
      %p46 = scmp.ne.s32.totalorder %s38, %s41
      %p47 = scmp.eq.s32.totalorder %s14, 0
      %p48 = por %p46, %p47
      %p49 = scmp.ne.s32.totalorder %s38, %s41
      %p50 = scmp.eq.s32.totalorder %s19, 1
      %p51 = por %p49, %p50
      %p52 = scmp.ne.s32.totalorder %s41, %s42
      %p53 = scmp.eq.s32.totalorder %s19, 0
      %p54 = por %p52, %p53
      %p55 = scmp.ne.s32.totalorder %s41, %s42
      %p56 = scmp.eq.s32.totalorder %s20, 1
      %p57 = por %p55, %p56
      %p59 = scmp.ne.s32.totalorder %s42, %s58
      %p60 = scmp.eq.s32.totalorder %s20, 0
      %p61 = por %p59, %p60
      %s63 = sadd.s32 %s62, 1
      %p66 = scmp.eq.s32.totalorder %s14, 1
      %p67 = scmp.ne.s32.totalorder %s62, %s64
      %p68 = scmp.eq.s32.totalorder %s14, 0
      %p69 = por %p67, %p68
      %p70 = scmp.ne.s32.totalorder %s62, %s64
      %p71 = scmp.eq.s32.totalorder %s19, 1
      %p72 = por %p70, %p71
      %p73 = scmp.ne.s32.totalorder %s64, %s65
      %p74 = scmp.eq.s32.totalorder %s19, 0
      %p75 = por %p73, %p74
      %p76 = scmp.ne.s32.totalorder %s64, %s65
      %p77 = scmp.eq.s32.totalorder %s20, 1
      %p78 = por %p76, %p77
      %p80 = scmp.ne.s32.totalorder %s65, %s79
      %p81 = scmp.eq.s32.totalorder %s20, 0
      %p82 = por %p80, %p81
      %s84 = sadd.s32 %s83, 1
      %p87 = scmp.eq.s32.totalorder %s14, 1
      %p88 = scmp.ne.s32.totalorder %s83, %s85
      %p89 = scmp.eq.s32.totalorder %s14, 0
      %p90 = por %p88, %p89
      %p91 = scmp.ne.s32.totalorder %s83, %s85
      %p92 = scmp.eq.s32.totalorder %s19, 1
      %p93 = por %p91, %p92
      %p94 = scmp.ne.s32.totalorder %s85, %s86
      %p95 = scmp.eq.s32.totalorder %s19, 0
      %p96 = por %p94, %p95
      %p97 = scmp.ne.s32.totalorder %s85, %s86
      %p98 = scmp.eq.s32.totalorder %s20, 1
      %p99 = por %p97, %p98
      %p101 = scmp.ne.s32.totalorder %s86, %s100
      %p102 = scmp.eq.s32.totalorder %s20, 0
      %p103 = por %p101, %p102
      %s105 = sadd.s32 %s104, 1
      %p108 = scmp.eq.s32.totalorder %s14, 1
      %p109 = scmp.ne.s32.totalorder %s104, %s106
      %p110 = scmp.eq.s32.totalorder %s14, 0
      %p111 = por %p109, %p110
      %p112 = scmp.ne.s32.totalorder %s104, %s106
      %p113 = scmp.eq.s32.totalorder %s19, 1
      %p114 = por %p112, %p113
      %p115 = scmp.ne.s32.totalorder %s106, %s107
      %p116 = scmp.eq.s32.totalorder %s19, 0
      %p117 = por %p115, %p116
      %p118 = scmp.ne.s32.totalorder %s106, %s107
      %p119 = scmp.eq.s32.totalorder %s20, 1
      %p120 = por %p118, %p119
      %p122 = scmp.ne.s32.totalorder %s107, %s121
      %p123 = scmp.eq.s32.totalorder %s20, 0
      %p124 = por %p122, %p123
      %s126 = sadd.s32 %s125, 1
      %p129 = scmp.eq.s32.totalorder %s14, 1
      %p130 = scmp.ne.s32.totalorder %s125, %s127
      %p131 = scmp.eq.s32.totalorder %s14, 0
      %p132 = por %p130, %p131
      %p133 = scmp.ne.s32.totalorder %s125, %s127
      %p134 = scmp.eq.s32.totalorder %s19, 1
      %p135 = por %p133, %p134
      %p136 = scmp.ne.s32.totalorder %s127, %s128
      %p137 = scmp.eq.s32.totalorder %s19, 0
      %p138 = por %p136, %p137
      %p139 = scmp.ne.s32.totalorder %s127, %s128
      %p140 = scmp.eq.s32.totalorder %s20, 1
      %p141 = por %p139, %p140
      %p143 = scmp.ne.s32.totalorder %s128, %s142
      %p144 = scmp.eq.s32.totalorder %s20, 0
      %p145 = por %p143, %p144
      %s147 = sadd.s32 %s146, 1
      %p150 = scmp.eq.s32.totalorder %s14, 1
      %p151 = scmp.ne.s32.totalorder %s146, %s148
      %p152 = scmp.eq.s32.totalorder %s14, 0
      %p153 = por %p151, %p152
      %p154 = scmp.ne.s32.totalorder %s146, %s148
      %p155 = scmp.eq.s32.totalorder %s19, 1
      %p156 = por %p154, %p155
      %p157 = scmp.ne.s32.totalorder %s148, %s149
      %p158 = scmp.eq.s32.totalorder %s19, 0
      %p159 = por %p157, %p158
      %p160 = scmp.ne.s32.totalorder %s148, %s149
      %p161 = scmp.eq.s32.totalorder %s20, 1
      %p162 = por %p160, %p161
      %p164 = scmp.ne.s32.totalorder %s149, %s163
      %p165 = scmp.eq.s32.totalorder %s20, 0
      %p166 = por %p164, %p165
      %s167 = ssub.s32 %s21, %s33
      %p168 = scmp.eq.s32.totalorder %s167, 0
      %s170 = sadd.s32 %s169, 1
      %s171 = scalar_select %p168, %s169, %s170
      %p174 = pneg %p168
      %p175 = scmp.eq.s32.totalorder %s14, 1
      %p176 = por %p174, %p175
      %p177 = scmp.ne.s32.totalorder %s169, %s172
      %p178 = scmp.eq.s32.totalorder %s14, 0
      %p179 = por %p177, %p178
      %p180 = scmp.ne.s32.totalorder %s169, %s172
      %p181 = scmp.eq.s32.totalorder %s19, 1
      %p182 = por %p180, %p181
      %p183 = scmp.ne.s32.totalorder %s172, %s173
      %p184 = scmp.eq.s32.totalorder %s19, 0
      %p185 = por %p183, %p184
      %p186 = scmp.ne.s32.totalorder %s172, %s173
      %p187 = scmp.eq.s32.totalorder %s20, 1
      %p188 = por %p186, %p187
      %p190 = scmp.ne.s32.totalorder %s173, %s189
      %p191 = scmp.eq.s32.totalorder %s20, 0
      %p192 = por %p190, %p191
      %p193 = scmp.le.s32.totalorder 1, %s14
      %p194 = scmp.lt.s32.totalorder %s14, 3
      %p195 = pnand %p193, %p194
      %p196 = pneg %p195
      // Predicated region
      $region9: #{tpu_custom_call.1} parent=5 // pred_check
        _
      $region10: #{tpu_custom_call.1} parent=5 // pred_check_branch
        %198 = sbr.rel (%p195) target = $region12
      $region11: #{tpu_custom_call.1} parent=5 // pred_region
        %s199 = ssub.s32 %s14, 1
        // Predicated region
        $region13: #{tpu_custom_call.1} parent=11 // pred_check
          %p200 = pneg %p75
        $region14: #{tpu_custom_call.1} parent=11 // pred_check_branch
          %202 = sbr.rel (%p200) target = $region16
        $region15: #{tpu_custom_call.1} parent=11 // pred_region
          _
        $region16: #{tpu_custom_call.1} parent=11 // pred_fallthru
          _
        // Predicated region
        $region17: #{tpu_custom_call.1} parent=11 // pred_check
          %p203 = pneg %p96
        $region18: #{tpu_custom_call.1} parent=11 // pred_check_branch
          %205 = sbr.rel (%p203) target = $region20
        $region19: #{tpu_custom_call.1} parent=11 // pred_region
          _
        $region20: #{tpu_custom_call.1} parent=11 // pred_fallthru
          _
        // Predicated region
        $region21: #{tpu_custom_call.1} parent=11 // pred_check
          %p206 = pneg %p117
        $region22: #{tpu_custom_call.1} parent=11 // pred_check_branch
          %208 = sbr.rel (%p206) target = $region24
        $region23: #{tpu_custom_call.1} parent=11 // pred_region
          _
        $region24: #{tpu_custom_call.1} parent=11 // pred_fallthru
          _
        // Predicated region
        $region25: #{tpu_custom_call.1} parent=11 // pred_check
          %p209 = pneg %p138
        $region26: #{tpu_custom_call.1} parent=11 // pred_check_branch
          %211 = sbr.rel (%p209) target = $region28
        $region27: #{tpu_custom_call.1} parent=11 // pred_region
          %s213 = ssub.s32 2048, 2048
          %214 = vsyncadd [#allocation5], %s213
          %s215 = sshll.u32 [#allocation4], 4
          %s216 = int_to_ptr.vmem [resolvable:$true] %s215
          %221 = dma.hbm_to_vmem [thread:$0]  %s4, 2048, %s216, [#allocation5], 128, 128, 8
        $region28: #{tpu_custom_call.1} parent=11 // pred_fallthru
          _
        // Predicated region
        $region29: #{tpu_custom_call.1} parent=11 // pred_check
          %p222 = pneg %p159
        $region30: #{tpu_custom_call.1} parent=11 // pred_check_branch
          %224 = sbr.rel (%p222) target = $region32
        $region31: #{tpu_custom_call.1} parent=11 // pred_region
          _
        $region32: #{tpu_custom_call.1} parent=11 // pred_fallthru
          _
      $region12: #{tpu_custom_call.1} parent=5 // pred_fallthru
        _
      %p225 = scmp.lt.s32.totalorder %s14, 2
      // Predicated region
      $region33: #{tpu_custom_call.1} parent=5 // pred_check
        %p226 = pneg %p225
      $region34: #{tpu_custom_call.1} parent=5 // pred_check_branch
        %228 = sbr.rel (%p226) target = $region36
      $region35: #{tpu_custom_call.1} parent=5 // pred_region
        // Predicated region
        $region37: #{tpu_custom_call.1} parent=35 // pred_check
          %p229 = pneg %p48
        $region38: #{tpu_custom_call.1} parent=35 // pred_check_branch
          %231 = sbr.rel (%p229) target = $region40
        $region39: #{tpu_custom_call.1} parent=35 // pred_region
          %s232 = smul.u32 8, %s22
          %p233 = scmp.lt.s32.totalorder %s21, 0
          %s234 = scalar_select %p233, %s21, 0
          %p235 = scmp.lt.s32.totalorder %s232, 15
          %s236 = scalar_select %p235, %s232, 15
          %s237 = smul.addr %s234, 16
          %s238 = sadd.s32 %s236, %s237
          %s239 = smul.addr %s238, 8
          %s240 = scalar_lea.vmem %s0, %s239
          %s241 = smul.u32 8, %s22
        $region40: #{tpu_custom_call.1} parent=35 // pred_fallthru
          _
      $region36: #{tpu_custom_call.1} parent=5 // pred_fallthru
        _
      %p242 = scmp.le.s32.totalorder 1, %s14
      %p243 = scmp.lt.s32.totalorder %s14, 3
      %p244 = pnand %p242, %p243
      %p245 = pneg %p244
      // Predicated region
      $region41: #{tpu_custom_call.1} parent=5 // pred_check
        _
      $region42: #{tpu_custom_call.1} parent=5 // pred_check_branch
        %247 = sbr.rel (%p244) target = $region44
      $region43: #{tpu_custom_call.1} parent=5 // pred_region
        %s248 = ssub.s32 %s14, 1
        // Predicated region
        $region45: #{tpu_custom_call.1} parent=43 // pred_check
          %p249 = pneg %p138
        $region46: #{tpu_custom_call.1} parent=43 // pred_check_branch
          %251 = sbr.rel (%p249) target = $region48
        $region47: #{tpu_custom_call.1} parent=43 // pred_region
          %252 = dma.done [#allocation5], 2048
        $region48: #{tpu_custom_call.1} parent=43 // pred_fallthru
          _
        %s253 = smul.u32 8, %s24
        %p254 = scmp.lt.s32.totalorder %s23, 0
        %s255 = scalar_select %p254, %s23, 0
        %p256 = scmp.lt.s32.totalorder %s253, 15
        %s257 = scalar_select %p256, %s253, 15
        %s258 = smul.addr %s255, 16
        %s259 = sadd.s32 %s257, %s258
        %s260 = smul.addr %s259, 8
        %s261 = scalar_lea.vmem %s0, %s260
        %p262 = pneg %p54
        %p263 = pneg %p51
        %p264 = pneg %p75
        %p265 = pneg %p72
        %p266 = pneg %p96
        %p267 = pneg %p93
        %p268 = pneg %p117
        %p269 = pneg %p114
        %p270 = pneg %p138
        %p271 = pneg %p135
        %p272 = pneg %p159
        %p273 = pneg %p156
        %p274 = pneg %p185
        %p275 = pneg %p182
        %s276 = smul.u32 8, %s24
        %p277 = scmp.lt.s32.totalorder %s23, 0
        %s278 = scalar_select %p277, %s23, 0
        %p279 = scmp.lt.s32.totalorder %s276, 15
        %s280 = scalar_select %p279, %s276, 15
        %s281 = smul.addr %s278, 16
        %s282 = sadd.s32 %s280, %s281
        %s283 = smul.addr %s282, 8
        %s284 = scalar_lea.vmem %s0, %s283
        %s285 = smul.u32 8, %s24
        %v286 = vld [vmem:[%s284] sm:$0xff]
        %v287 = vld [vmem:[%s284 + $0x8] sm:$0xff]
        %v288 = vld [vmem:[%s284 + $0x10] sm:$0xff]
        %v289 = vld [vmem:[%s284 + $0x18] sm:$0xff]
        %v290 = vld [vmem:[%s284 + $0x20] sm:$0xff]
        %v291 = vld [vmem:[%s284 + $0x28] sm:$0xff]
        %v292 = vld [vmem:[%s284 + $0x30] sm:$0xff]
        %v293 = vld [vmem:[%s284 + $0x38] sm:$0xff]
        %v294 = vld [vmem:[%s1] sm:$0xf]
        %v295 = vld [vmem:[%s2] sm:$0x1]
        %v297 = vlaneseq
        %v298 = vshrl.u32 %v297, 7
        %v299 = vsub.s32 0, %v298
        %v300 = vrot.slane %v295, %v299
        %vm302 = vcmask 31744
        %v304 = vsel %vm302, %v286, 0
        %v307 = vsel %vm302, %v287, 0
        %v310 = vsel %vm302, %v288, 0
        %v313 = vsel %vm302, %v289, 0
        %v316 = vsel %vm302, %v290, 0
        %v319 = vsel %vm302, %v291, 0
        %v322 = vsel %vm302, %v292, 0
        %v325 = vsel %vm302, %v293, 0
        %vm327 = vcmask 1043456
        %v329 = vsel %vm327, %v294, 0
        %331 = vmatprep.subr.mxu0 0.0
        %332 = vmatpush1.msra.mxu0 0.0
        %333 = vmatprep.subr.mxu0 0.0
        %334 = vmatpush1.msra.mxu0 0.0
        %335 = vmatprep.subr.mxu0 0.0
        %336 = vmatpush1.msra.mxu0 0.0
        %337 = vmatprep.subr.mxu0 0.0
        %338 = vmatpush1.msra.mxu0 0.0
        %339 = vmatprep.subr.mxu0 0.0
        %340 = vmatpush1.msra.mxu0 0.0
        %341 = vmatprep.subr.mxu0 0.0
        %342 = vmatpush1.msra.mxu0 0.0
        %343 = vmatprep.subr.mxu0 0.0
        %344 = vmatpush1.msra.mxu0 0.0
        %345 = vmatprep.subr.mxu0 0.0
        %346 = vmatpush1.msra.mxu0 0.0
        %347 = vmatprep.subr.mxu0 0.0
        %348 = vmatpush1.msra.mxu0 0.0
        %349 = vmatprep.subr.mxu0 0.0
        %350 = vmatpush1.msra.mxu0 0.0
        %351 = vmatprep.subr.mxu0 0.0
        %352 = vmatpush1.msra.mxu0 0.0
        %353 = vmatprep.subr.mxu0 0.0
        %354 = vmatpush1.msra.mxu0 0.0
        %355 = vmatprep.subr.mxu0 0.0
        %356 = vmatpush1.msra.mxu0 0.0
        %357 = vmatprep.subr.mxu0 0.0
        %358 = vmatpush1.msra.mxu0 0.0
        %359 = vmatprep.subr.mxu0 0.0
        %360 = vmatpush1.msra.mxu0 0.0
        %361 = vmatprep.subr.mxu0 0.0
        %362 = vmatpush1.msra.mxu0 %v329
        %363 = vmatprep.subr.mxu0 0.0
        %364 = vmatpush2.msra.mxu0 0.0
        %365 = vmatprep.subr.mxu0 0.0
        %366 = vmatpush2.msra.mxu0 0.0
        %367 = vmatprep.subr.mxu0 0.0
        %368 = vmatpush2.msra.mxu0 0.0
        %369 = vmatprep.subr.mxu0 0.0
        %370 = vmatpush2.msra.mxu0 0.0
        %371 = vmatprep.subr.mxu0 0.0
        %372 = vmatpush2.msra.mxu0 0.0
        %373 = vmatprep.subr.mxu0 0.0
        %374 = vmatpush2.msra.mxu0 0.0
        %375 = vmatprep.subr.mxu0 0.0
        %376 = vmatpush2.msra.mxu0 0.0
        %377 = vmatprep.subr.mxu0 0.0
        %378 = vmatpush2.msra.mxu0 0.0
        %379 = vmatprep.subr.mxu0 0.0
        %380 = vmatpush2.msra.mxu0 0.0
        %381 = vmatprep.subr.mxu0 0.0
        %382 = vmatpush2.msra.mxu0 0.0
        %383 = vmatprep.subr.mxu0 0.0
        %384 = vmatpush2.msra.mxu0 0.0
        %385 = vmatprep.subr.mxu0 0.0
        %386 = vmatpush2.msra.mxu0 0.0
        %387 = vmatprep.subr.mxu0 0.0
        %388 = vmatpush2.msra.mxu0 0.0
        %389 = vmatprep.subr.mxu0 0.0
        %390 = vmatpush2.msra.mxu0 0.0
        %391 = vmatprep.subr.mxu0 0.0
        %392 = vmatpush2.msra.mxu0 0.0
        %393 = vmatprep.subr.mxu0 0.0
        %394 = vmatpush2.msra.mxu0 0.0
        %395 = vmatprep.mubr.f32.mxu0 0.0
        %396 = vmatmul.mubr.f32.gmra.mxu0 %v304
        %v397 = vpop.f32.mrf.mxu0
        %v398 = vadd.f32 %v300, %v397
        %v399 = vpop.f32.mrf.mxu0
        %400 = vmatprep.mubr.f32.mxu0 0.0
        %401 = vmatmul.mubr.f32.gmra.mxu0 %v307
        %v402 = vpop.f32.mrf.mxu0
        %v403 = vadd.f32 %v300, %v402
        %v404 = vpop.f32.mrf.mxu0
        %405 = vmatprep.mubr.f32.mxu0 0.0
        %406 = vmatmul.mubr.f32.gmra.mxu0 %v310
        %v407 = vpop.f32.mrf.mxu0
        %v408 = vadd.f32 %v300, %v407
        %v409 = vpop.f32.mrf.mxu0
        %410 = vmatprep.mubr.f32.mxu0 0.0
        %411 = vmatmul.mubr.f32.gmra.mxu0 %v313
        %v412 = vpop.f32.mrf.mxu0
        %v413 = vadd.f32 %v300, %v412
        %v414 = vpop.f32.mrf.mxu0
        %415 = vmatprep.mubr.f32.mxu0 0.0
        %416 = vmatmul.mubr.f32.gmra.mxu0 %v316
        %v417 = vpop.f32.mrf.mxu0
        %v418 = vadd.f32 %v300, %v417
        %v419 = vpop.f32.mrf.mxu0
        %420 = vmatprep.mubr.f32.mxu0 0.0
        %421 = vmatmul.mubr.f32.gmra.mxu0 %v319
        %v422 = vpop.f32.mrf.mxu0
        %v423 = vadd.f32 %v300, %v422
        %v424 = vpop.f32.mrf.mxu0
        %425 = vmatprep.mubr.f32.mxu0 0.0
        %426 = vmatmul.mubr.f32.gmra.mxu0 %v322
        %v427 = vpop.f32.mrf.mxu0
        %v428 = vadd.f32 %v300, %v427
        %v429 = vpop.f32.mrf.mxu0
        %430 = vmatprep.mubr.f32.mxu0 0.0
        %431 = vmatmul.mubr.f32.gmra.mxu0 %v325
        %v432 = vpop.f32.mrf.mxu0
        %v433 = vadd.f32 %v300, %v432
        %v434 = vpop.f32.mrf.mxu0
        %435 = vdwg.mxu0
        %436 = vst [vmem:[#allocation2] sm:$0xff] %v398
        %437 = vst [vmem:[#allocation2 + $0x8] sm:$0xff] %v403
        %438 = vst [vmem:[#allocation2 + $0x10] sm:$0xff] %v408
        %439 = vst [vmem:[#allocation2 + $0x18] sm:$0xff] %v413
        %440 = vst [vmem:[#allocation2 + $0x20] sm:$0xff] %v418
        %441 = vst [vmem:[#allocation2 + $0x28] sm:$0xff] %v423
        %442 = vst [vmem:[#allocation2 + $0x30] sm:$0xff] %v428
        %443 = vst [vmem:[#allocation2 + $0x38] sm:$0xff] %v433
        %p444 = scmp.eq.s32.totalorder %s24, 0
        // Predicated region
        $region49: #{tpu_custom_call.1} parent=43 // pred_check
          %p445 = pneg %p444
        $region50: #{tpu_custom_call.1} parent=43 // pred_check_branch
          %447 = sbr.rel (%p445) target = $region52
        $region51: #{tpu_custom_call.1} parent=43 // pred_region
          %448 = vst [vmem:[#allocation3] sm:$0xff] 0.0
        $region52: #{tpu_custom_call.1} parent=43 // pred_fallthru
          _
        %v449 = vld [vmem:[#allocation3] sm:$0xff]
        %v450 = vld [vmem:[%s3] sm:$0xff]
        %v451 = vld [vmem:[%s3 + $0x8] sm:$0xff]
        %v452 = vld [vmem:[%s3 + $0x10] sm:$0xff]
        %v453 = vld [vmem:[%s3 + $0x18] sm:$0xff]
        %v454 = vld [vmem:[%s3 + $0x20] sm:$0xff]
        %v455 = vld [vmem:[%s3 + $0x28] sm:$0xff]
        %v456 = vld [vmem:[%s3 + $0x30] sm:$0xff]
        %v457 = vld [vmem:[%s3 + $0x38] sm:$0xff]
        %v458 = vld [vmem:[%s3 + $0x40] sm:$0xff]
        %v459 = vld [vmem:[%s3 + $0x48] sm:$0xff]
        %v460 = vld [vmem:[%s3 + $0x50] sm:$0xff]
        %v461 = vld [vmem:[%s3 + $0x58] sm:$0xff]
        %v462 = vld [vmem:[%s3 + $0x60] sm:$0xff]
        %v463 = vld [vmem:[%s3 + $0x68] sm:$0xff]
        %v464 = vld [vmem:[%s3 + $0x70] sm:$0xff]
        %v465 = vld [vmem:[%s3 + $0x78] sm:$0xff]
        %v466 = vld [vmem:[#allocation2] sm:$0xff]
        %467 = vmatprep.subr.mxu0 0.0
        %468 = vmatpush1.msra.mxu0 %v465
        %469 = vmatprep.subr.mxu0 0.0
        %470 = vmatpush1.msra.mxu0 %v464
        %471 = vmatprep.subr.mxu0 0.0
        %472 = vmatpush1.msra.mxu0 %v463
        %473 = vmatprep.subr.mxu0 0.0
        %474 = vmatpush1.msra.mxu0 %v462
        %475 = vmatprep.subr.mxu0 0.0
        %476 = vmatpush1.msra.mxu0 %v461
        %477 = vmatprep.subr.mxu0 0.0
        %478 = vmatpush1.msra.mxu0 %v460
        %479 = vmatprep.subr.mxu0 0.0
        %480 = vmatpush1.msra.mxu0 %v459
        %481 = vmatprep.subr.mxu0 0.0
        %482 = vmatpush1.msra.mxu0 %v458
        %483 = vmatprep.subr.mxu0 0.0
        %484 = vmatpush1.msra.mxu0 %v457
        %485 = vmatprep.subr.mxu0 0.0
        %486 = vmatpush1.msra.mxu0 %v456
        %487 = vmatprep.subr.mxu0 0.0
        %488 = vmatpush1.msra.mxu0 %v455
        %489 = vmatprep.subr.mxu0 0.0
        %490 = vmatpush1.msra.mxu0 %v454
        %491 = vmatprep.subr.mxu0 0.0
        %492 = vmatpush1.msra.mxu0 %v453
        %493 = vmatprep.subr.mxu0 0.0
        %494 = vmatpush1.msra.mxu0 %v452
        %495 = vmatprep.subr.mxu0 0.0
        %496 = vmatpush1.msra.mxu0 %v451
        %497 = vmatprep.subr.mxu0 0.0
        %498 = vmatpush1.msra.mxu0 %v450
        %499 = vmatprep.subr.mxu0 0.0
        %500 = vmatpush2.msra.mxu0 0.0
        %501 = vmatprep.subr.mxu0 0.0
        %502 = vmatpush2.msra.mxu0 0.0
        %503 = vmatprep.subr.mxu0 0.0
        %504 = vmatpush2.msra.mxu0 0.0
        %505 = vmatprep.subr.mxu0 0.0
        %506 = vmatpush2.msra.mxu0 0.0
        %507 = vmatprep.subr.mxu0 0.0
        %508 = vmatpush2.msra.mxu0 0.0
        %509 = vmatprep.subr.mxu0 0.0
        %510 = vmatpush2.msra.mxu0 0.0
        %511 = vmatprep.subr.mxu0 0.0
        %512 = vmatpush2.msra.mxu0 0.0
        %513 = vmatprep.subr.mxu0 0.0
        %514 = vmatpush2.msra.mxu0 0.0
        %515 = vmatprep.subr.mxu0 0.0
        %516 = vmatpush2.msra.mxu0 0.0
        %517 = vmatprep.subr.mxu0 0.0
        %518 = vmatpush2.msra.mxu0 0.0
        %519 = vmatprep.subr.mxu0 0.0
        %520 = vmatpush2.msra.mxu0 0.0
        %521 = vmatprep.subr.mxu0 0.0
        %522 = vmatpush2.msra.mxu0 0.0
        %523 = vmatprep.subr.mxu0 0.0
        %524 = vmatpush2.msra.mxu0 0.0
        %525 = vmatprep.subr.mxu0 0.0
        %526 = vmatpush2.msra.mxu0 0.0
        %527 = vmatprep.subr.mxu0 0.0
        %528 = vmatpush2.msra.mxu0 0.0
        %529 = vmatprep.subr.mxu0 0.0
        %530 = vmatpush2.msra.mxu0 0.0
        %531 = vmatprep.mubr.f32.mxu0 0.0
        %532 = vmatmul.mubr.f32.gmra.mxu0 %v449
        %v533 = vpop.f32.mrf.mxu0
        %v534 = vadd.f32 %v466, %v533
        %v535 = vpop.f32.mrf.mxu0
        %536 = vdwg.mxu0
        %v537 = vtanh.pop %v534
        %v538 = vld [vmem:[#allocation2 + $0x8] sm:$0xff]
        %539 = vmatprep.subr.mxu0 0.0
        %540 = vmatpush1.msra.mxu0 %v465
        %541 = vmatprep.subr.mxu0 0.0
        %542 = vmatpush1.msra.mxu0 %v464
        %543 = vmatprep.subr.mxu0 0.0
        %544 = vmatpush1.msra.mxu0 %v463
        %545 = vmatprep.subr.mxu0 0.0
        %546 = vmatpush1.msra.mxu0 %v462
        %547 = vmatprep.subr.mxu0 0.0
        %548 = vmatpush1.msra.mxu0 %v461
        %549 = vmatprep.subr.mxu0 0.0
        %550 = vmatpush1.msra.mxu0 %v460
        %551 = vmatprep.subr.mxu0 0.0
        %552 = vmatpush1.msra.mxu0 %v459
        %553 = vmatprep.subr.mxu0 0.0
        %554 = vmatpush1.msra.mxu0 %v458
        %555 = vmatprep.subr.mxu0 0.0
        %556 = vmatpush1.msra.mxu0 %v457
        %557 = vmatprep.subr.mxu0 0.0
        %558 = vmatpush1.msra.mxu0 %v456
        %559 = vmatprep.subr.mxu0 0.0
        %560 = vmatpush1.msra.mxu0 %v455
        %561 = vmatprep.subr.mxu0 0.0
        %562 = vmatpush1.msra.mxu0 %v454
        %563 = vmatprep.subr.mxu0 0.0
        %564 = vmatpush1.msra.mxu0 %v453
        %565 = vmatprep.subr.mxu0 0.0
        %566 = vmatpush1.msra.mxu0 %v452
        %567 = vmatprep.subr.mxu0 0.0
        %568 = vmatpush1.msra.mxu0 %v451
        %569 = vmatprep.subr.mxu0 0.0
        %570 = vmatpush1.msra.mxu0 %v450
        %571 = vmatprep.subr.mxu0 0.0
        %572 = vmatpush2.msra.mxu0 0.0
        %573 = vmatprep.subr.mxu0 0.0
        %574 = vmatpush2.msra.mxu0 0.0
        %575 = vmatprep.subr.mxu0 0.0
        %576 = vmatpush2.msra.mxu0 0.0
        %577 = vmatprep.subr.mxu0 0.0
        %578 = vmatpush2.msra.mxu0 0.0
        %579 = vmatprep.subr.mxu0 0.0
        %580 = vmatpush2.msra.mxu0 0.0
        %581 = vmatprep.subr.mxu0 0.0
        %582 = vmatpush2.msra.mxu0 0.0
        %583 = vmatprep.subr.mxu0 0.0
        %584 = vmatpush2.msra.mxu0 0.0
        %585 = vmatprep.subr.mxu0 0.0
        %586 = vmatpush2.msra.mxu0 0.0
        %587 = vmatprep.subr.mxu0 0.0
        %588 = vmatpush2.msra.mxu0 0.0
        %589 = vmatprep.subr.mxu0 0.0
        %590 = vmatpush2.msra.mxu0 0.0
        %591 = vmatprep.subr.mxu0 0.0
        %592 = vmatpush2.msra.mxu0 0.0
        %593 = vmatprep.subr.mxu0 0.0
        %594 = vmatpush2.msra.mxu0 0.0
        %595 = vmatprep.subr.mxu0 0.0
        %596 = vmatpush2.msra.mxu0 0.0
        %597 = vmatprep.subr.mxu0 0.0
        %598 = vmatpush2.msra.mxu0 0.0
        %599 = vmatprep.subr.mxu0 0.0
        %600 = vmatpush2.msra.mxu0 0.0
        %601 = vmatprep.subr.mxu0 0.0
        %602 = vmatpush2.msra.mxu0 0.0
        %603 = vmatprep.mubr.f32.mxu0 0.0
        %604 = vmatmul.mubr.f32.gmra.mxu0 %v537
        %v605 = vpop.f32.mrf.mxu0
        %v606 = vadd.f32 %v538, %v605
        %v607 = vpop.f32.mrf.mxu0
        %608 = vdwg.mxu0
        %v609 = vtanh.pop %v606
        %v610 = vld [vmem:[#allocation2 + $0x10] sm:$0xff]
        %611 = vmatprep.subr.mxu0 0.0
        %612 = vmatpush1.msra.mxu0 %v465
        %613 = vmatprep.subr.mxu0 0.0
        %614 = vmatpush1.msra.mxu0 %v464
        %615 = vmatprep.subr.mxu0 0.0
        %616 = vmatpush1.msra.mxu0 %v463
        %617 = vmatprep.subr.mxu0 0.0
        %618 = vmatpush1.msra.mxu0 %v462
        %619 = vmatprep.subr.mxu0 0.0
        %620 = vmatpush1.msra.mxu0 %v461
        %621 = vmatprep.subr.mxu0 0.0
        %622 = vmatpush1.msra.mxu0 %v460
        %623 = vmatprep.subr.mxu0 0.0
        %624 = vmatpush1.msra.mxu0 %v459
        %625 = vmatprep.subr.mxu0 0.0
        %626 = vmatpush1.msra.mxu0 %v458
        %627 = vmatprep.subr.mxu0 0.0
        %628 = vmatpush1.msra.mxu0 %v457
        %629 = vmatprep.subr.mxu0 0.0
        %630 = vmatpush1.msra.mxu0 %v456
        %631 = vmatprep.subr.mxu0 0.0
        %632 = vmatpush1.msra.mxu0 %v455
        %633 = vmatprep.subr.mxu0 0.0
        %634 = vmatpush1.msra.mxu0 %v454
        %635 = vmatprep.subr.mxu0 0.0
        %636 = vmatpush1.msra.mxu0 %v453
        %637 = vmatprep.subr.mxu0 0.0
        %638 = vmatpush1.msra.mxu0 %v452
        %639 = vmatprep.subr.mxu0 0.0
        %640 = vmatpush1.msra.mxu0 %v451
        %641 = vmatprep.subr.mxu0 0.0
        %642 = vmatpush1.msra.mxu0 %v450
        %643 = vmatprep.subr.mxu0 0.0
        %644 = vmatpush2.msra.mxu0 0.0
        %645 = vmatprep.subr.mxu0 0.0
        %646 = vmatpush2.msra.mxu0 0.0
        %647 = vmatprep.subr.mxu0 0.0
        %648 = vmatpush2.msra.mxu0 0.0
        %649 = vmatprep.subr.mxu0 0.0
        %650 = vmatpush2.msra.mxu0 0.0
        %651 = vmatprep.subr.mxu0 0.0
        %652 = vmatpush2.msra.mxu0 0.0
        %653 = vmatprep.subr.mxu0 0.0
        %654 = vmatpush2.msra.mxu0 0.0
        %655 = vmatprep.subr.mxu0 0.0
        %656 = vmatpush2.msra.mxu0 0.0
        %657 = vmatprep.subr.mxu0 0.0
        %658 = vmatpush2.msra.mxu0 0.0
        %659 = vmatprep.subr.mxu0 0.0
        %660 = vmatpush2.msra.mxu0 0.0
        %661 = vmatprep.subr.mxu0 0.0
        %662 = vmatpush2.msra.mxu0 0.0
        %663 = vmatprep.subr.mxu0 0.0
        %664 = vmatpush2.msra.mxu0 0.0
        %665 = vmatprep.subr.mxu0 0.0
        %666 = vmatpush2.msra.mxu0 0.0
        %667 = vmatprep.subr.mxu0 0.0
        %668 = vmatpush2.msra.mxu0 0.0
        %669 = vmatprep.subr.mxu0 0.0
        %670 = vmatpush2.msra.mxu0 0.0
        %671 = vmatprep.subr.mxu0 0.0
        %672 = vmatpush2.msra.mxu0 0.0
        %673 = vmatprep.subr.mxu0 0.0
        %674 = vmatpush2.msra.mxu0 0.0
        %675 = vmatprep.mubr.f32.mxu0 0.0
        %676 = vmatmul.mubr.f32.gmra.mxu0 %v609
        %v677 = vpop.f32.mrf.mxu0
        %v678 = vadd.f32 %v610, %v677
        %v679 = vpop.f32.mrf.mxu0
        %680 = vdwg.mxu0
        %v681 = vtanh.pop %v678
        %v682 = vld [vmem:[#allocation2 + $0x18] sm:$0xff]
        %683 = vmatprep.subr.mxu0 0.0
        %684 = vmatpush1.msra.mxu0 %v465
        %685 = vmatprep.subr.mxu0 0.0
        %686 = vmatpush1.msra.mxu0 %v464
        %687 = vmatprep.subr.mxu0 0.0
        %688 = vmatpush1.msra.mxu0 %v463
        %689 = vmatprep.subr.mxu0 0.0
        %690 = vmatpush1.msra.mxu0 %v462
        %691 = vmatprep.subr.mxu0 0.0
        %692 = vmatpush1.msra.mxu0 %v461
        %693 = vmatprep.subr.mxu0 0.0
        %694 = vmatpush1.msra.mxu0 %v460
        %695 = vmatprep.subr.mxu0 0.0
        %696 = vmatpush1.msra.mxu0 %v459
        %697 = vmatprep.subr.mxu0 0.0
        %698 = vmatpush1.msra.mxu0 %v458
        %699 = vmatprep.subr.mxu0 0.0
        %700 = vmatpush1.msra.mxu0 %v457
        %701 = vmatprep.subr.mxu0 0.0
        %702 = vmatpush1.msra.mxu0 %v456
        %703 = vmatprep.subr.mxu0 0.0
        %704 = vmatpush1.msra.mxu0 %v455
        %705 = vmatprep.subr.mxu0 0.0
        %706 = vmatpush1.msra.mxu0 %v454
        %707 = vmatprep.subr.mxu0 0.0
        %708 = vmatpush1.msra.mxu0 %v453
        %709 = vmatprep.subr.mxu0 0.0
        %710 = vmatpush1.msra.mxu0 %v452
        %711 = vmatprep.subr.mxu0 0.0
        %712 = vmatpush1.msra.mxu0 %v451
        %713 = vmatprep.subr.mxu0 0.0
        %714 = vmatpush1.msra.mxu0 %v450
        %715 = vmatprep.subr.mxu0 0.0
        %716 = vmatpush2.msra.mxu0 0.0
        %717 = vmatprep.subr.mxu0 0.0
        %718 = vmatpush2.msra.mxu0 0.0
        %719 = vmatprep.subr.mxu0 0.0
        %720 = vmatpush2.msra.mxu0 0.0
        %721 = vmatprep.subr.mxu0 0.0
        %722 = vmatpush2.msra.mxu0 0.0
        %723 = vmatprep.subr.mxu0 0.0
        %724 = vmatpush2.msra.mxu0 0.0
        %725 = vmatprep.subr.mxu0 0.0
        %726 = vmatpush2.msra.mxu0 0.0
        %727 = vmatprep.subr.mxu0 0.0
        %728 = vmatpush2.msra.mxu0 0.0
        %729 = vmatprep.subr.mxu0 0.0
        %730 = vmatpush2.msra.mxu0 0.0
        %731 = vmatprep.subr.mxu0 0.0
        %732 = vmatpush2.msra.mxu0 0.0
        %733 = vmatprep.subr.mxu0 0.0
        %734 = vmatpush2.msra.mxu0 0.0
        %735 = vmatprep.subr.mxu0 0.0
        %736 = vmatpush2.msra.mxu0 0.0
        %737 = vmatprep.subr.mxu0 0.0
        %738 = vmatpush2.msra.mxu0 0.0
        %739 = vmatprep.subr.mxu0 0.0
        %740 = vmatpush2.msra.mxu0 0.0
        %741 = vmatprep.subr.mxu0 0.0
        %742 = vmatpush2.msra.mxu0 0.0
        %743 = vmatprep.subr.mxu0 0.0
        %744 = vmatpush2.msra.mxu0 0.0
        %745 = vmatprep.subr.mxu0 0.0
        %746 = vmatpush2.msra.mxu0 0.0
        %747 = vmatprep.mubr.f32.mxu0 0.0
        %748 = vmatmul.mubr.f32.gmra.mxu0 %v681
        %v749 = vpop.f32.mrf.mxu0
        %v750 = vadd.f32 %v682, %v749
        %v751 = vpop.f32.mrf.mxu0
        %752 = vdwg.mxu0
        %v753 = vtanh.pop %v750
        %v754 = vld [vmem:[#allocation2 + $0x20] sm:$0xff]
        %755 = vmatprep.subr.mxu0 0.0
        %756 = vmatpush1.msra.mxu0 %v465
        %757 = vmatprep.subr.mxu0 0.0
        %758 = vmatpush1.msra.mxu0 %v464
        %759 = vmatprep.subr.mxu0 0.0
        %760 = vmatpush1.msra.mxu0 %v463
        %761 = vmatprep.subr.mxu0 0.0
        %762 = vmatpush1.msra.mxu0 %v462
        %763 = vmatprep.subr.mxu0 0.0
        %764 = vmatpush1.msra.mxu0 %v461
        %765 = vmatprep.subr.mxu0 0.0
        %766 = vmatpush1.msra.mxu0 %v460
        %767 = vmatprep.subr.mxu0 0.0
        %768 = vmatpush1.msra.mxu0 %v459
        %769 = vmatprep.subr.mxu0 0.0
        %770 = vmatpush1.msra.mxu0 %v458
        %771 = vmatprep.subr.mxu0 0.0
        %772 = vmatpush1.msra.mxu0 %v457
        %773 = vmatprep.subr.mxu0 0.0
        %774 = vmatpush1.msra.mxu0 %v456
        %775 = vmatprep.subr.mxu0 0.0
        %776 = vmatpush1.msra.mxu0 %v455
        %777 = vmatprep.subr.mxu0 0.0
        %778 = vmatpush1.msra.mxu0 %v454
        %779 = vmatprep.subr.mxu0 0.0
        %780 = vmatpush1.msra.mxu0 %v453
        %781 = vmatprep.subr.mxu0 0.0
        %782 = vmatpush1.msra.mxu0 %v452
        %783 = vmatprep.subr.mxu0 0.0
        %784 = vmatpush1.msra.mxu0 %v451
        %785 = vmatprep.subr.mxu0 0.0
        %786 = vmatpush1.msra.mxu0 %v450
        %787 = vmatprep.subr.mxu0 0.0
        %788 = vmatpush2.msra.mxu0 0.0
        %789 = vmatprep.subr.mxu0 0.0
        %790 = vmatpush2.msra.mxu0 0.0
        %791 = vmatprep.subr.mxu0 0.0
        %792 = vmatpush2.msra.mxu0 0.0
        %793 = vmatprep.subr.mxu0 0.0
        %794 = vmatpush2.msra.mxu0 0.0
        %795 = vmatprep.subr.mxu0 0.0
        %796 = vmatpush2.msra.mxu0 0.0
        %797 = vmatprep.subr.mxu0 0.0
        %798 = vmatpush2.msra.mxu0 0.0
        %799 = vmatprep.subr.mxu0 0.0
        %800 = vmatpush2.msra.mxu0 0.0
        %801 = vmatprep.subr.mxu0 0.0
        %802 = vmatpush2.msra.mxu0 0.0
        %803 = vmatprep.subr.mxu0 0.0
        %804 = vmatpush2.msra.mxu0 0.0
        %805 = vmatprep.subr.mxu0 0.0
        %806 = vmatpush2.msra.mxu0 0.0
        %807 = vmatprep.subr.mxu0 0.0
        %808 = vmatpush2.msra.mxu0 0.0
        %809 = vmatprep.subr.mxu0 0.0
        %810 = vmatpush2.msra.mxu0 0.0
        %811 = vmatprep.subr.mxu0 0.0
        %812 = vmatpush2.msra.mxu0 0.0
        %813 = vmatprep.subr.mxu0 0.0
        %814 = vmatpush2.msra.mxu0 0.0
        %815 = vmatprep.subr.mxu0 0.0
        %816 = vmatpush2.msra.mxu0 0.0
        %817 = vmatprep.subr.mxu0 0.0
        %818 = vmatpush2.msra.mxu0 0.0
        %819 = vmatprep.mubr.f32.mxu0 0.0
        %820 = vmatmul.mubr.f32.gmra.mxu0 %v753
        %v821 = vpop.f32.mrf.mxu0
        %v822 = vadd.f32 %v754, %v821
        %v823 = vpop.f32.mrf.mxu0
        %824 = vdwg.mxu0
        %v825 = vtanh.pop %v822
        %v826 = vld [vmem:[#allocation2 + $0x28] sm:$0xff]
        %827 = vmatprep.subr.mxu0 0.0
        %828 = vmatpush1.msra.mxu0 %v465
        %829 = vmatprep.subr.mxu0 0.0
        %830 = vmatpush1.msra.mxu0 %v464
        %831 = vmatprep.subr.mxu0 0.0
        %832 = vmatpush1.msra.mxu0 %v463
        %833 = vmatprep.subr.mxu0 0.0
        %834 = vmatpush1.msra.mxu0 %v462
        %835 = vmatprep.subr.mxu0 0.0
        %836 = vmatpush1.msra.mxu0 %v461
        %837 = vmatprep.subr.mxu0 0.0
        %838 = vmatpush1.msra.mxu0 %v460
        %839 = vmatprep.subr.mxu0 0.0
        %840 = vmatpush1.msra.mxu0 %v459
        %841 = vmatprep.subr.mxu0 0.0
        %842 = vmatpush1.msra.mxu0 %v458
        %843 = vmatprep.subr.mxu0 0.0
        %844 = vmatpush1.msra.mxu0 %v457
        %845 = vmatprep.subr.mxu0 0.0
        %846 = vmatpush1.msra.mxu0 %v456
        %847 = vmatprep.subr.mxu0 0.0
        %848 = vmatpush1.msra.mxu0 %v455
        %849 = vmatprep.subr.mxu0 0.0
        %850 = vmatpush1.msra.mxu0 %v454
        %851 = vmatprep.subr.mxu0 0.0
        %852 = vmatpush1.msra.mxu0 %v453
        %853 = vmatprep.subr.mxu0 0.0
        %854 = vmatpush1.msra.mxu0 %v452
        %855 = vmatprep.subr.mxu0 0.0
        %856 = vmatpush1.msra.mxu0 %v451
        %857 = vmatprep.subr.mxu0 0.0
        %858 = vmatpush1.msra.mxu0 %v450
        %859 = vmatprep.subr.mxu0 0.0
        %860 = vmatpush2.msra.mxu0 0.0
        %861 = vmatprep.subr.mxu0 0.0
        %862 = vmatpush2.msra.mxu0 0.0
        %863 = vmatprep.subr.mxu0 0.0
        %864 = vmatpush2.msra.mxu0 0.0
        %865 = vmatprep.subr.mxu0 0.0
        %866 = vmatpush2.msra.mxu0 0.0
        %867 = vmatprep.subr.mxu0 0.0
        %868 = vmatpush2.msra.mxu0 0.0
        %869 = vmatprep.subr.mxu0 0.0
        %870 = vmatpush2.msra.mxu0 0.0
        %871 = vmatprep.subr.mxu0 0.0
        %872 = vmatpush2.msra.mxu0 0.0
        %873 = vmatprep.subr.mxu0 0.0
        %874 = vmatpush2.msra.mxu0 0.0
        %875 = vmatprep.subr.mxu0 0.0
        %876 = vmatpush2.msra.mxu0 0.0
        %877 = vmatprep.subr.mxu0 0.0
        %878 = vmatpush2.msra.mxu0 0.0
        %879 = vmatprep.subr.mxu0 0.0
        %880 = vmatpush2.msra.mxu0 0.0
        %881 = vmatprep.subr.mxu0 0.0
        %882 = vmatpush2.msra.mxu0 0.0
        %883 = vmatprep.subr.mxu0 0.0
        %884 = vmatpush2.msra.mxu0 0.0
        %885 = vmatprep.subr.mxu0 0.0
        %886 = vmatpush2.msra.mxu0 0.0
        %887 = vmatprep.subr.mxu0 0.0
        %888 = vmatpush2.msra.mxu0 0.0
        %889 = vmatprep.subr.mxu0 0.0
        %890 = vmatpush2.msra.mxu0 0.0
        %891 = vmatprep.mubr.f32.mxu0 0.0
        %892 = vmatmul.mubr.f32.gmra.mxu0 %v825
        %v893 = vpop.f32.mrf.mxu0
        %v894 = vadd.f32 %v826, %v893
        %v895 = vpop.f32.mrf.mxu0
        %896 = vdwg.mxu0
        %v897 = vtanh.pop %v894
        %v898 = vld [vmem:[#allocation2 + $0x30] sm:$0xff]
        %899 = vmatprep.subr.mxu0 0.0
        %900 = vmatpush1.msra.mxu0 %v465
        %901 = vmatprep.subr.mxu0 0.0
        %902 = vmatpush1.msra.mxu0 %v464
        %903 = vmatprep.subr.mxu0 0.0
        %904 = vmatpush1.msra.mxu0 %v463
        %905 = vmatprep.subr.mxu0 0.0
        %906 = vmatpush1.msra.mxu0 %v462
        %907 = vmatprep.subr.mxu0 0.0
        %908 = vmatpush1.msra.mxu0 %v461
        %909 = vmatprep.subr.mxu0 0.0
        %910 = vmatpush1.msra.mxu0 %v460
        %911 = vmatprep.subr.mxu0 0.0
        %912 = vmatpush1.msra.mxu0 %v459
        %913 = vmatprep.subr.mxu0 0.0
        %914 = vmatpush1.msra.mxu0 %v458
        %915 = vmatprep.subr.mxu0 0.0
        %916 = vmatpush1.msra.mxu0 %v457
        %917 = vmatprep.subr.mxu0 0.0
        %918 = vmatpush1.msra.mxu0 %v456
        %919 = vmatprep.subr.mxu0 0.0
        %920 = vmatpush1.msra.mxu0 %v455
        %921 = vmatprep.subr.mxu0 0.0
        %922 = vmatpush1.msra.mxu0 %v454
        %923 = vmatprep.subr.mxu0 0.0
        %924 = vmatpush1.msra.mxu0 %v453
        %925 = vmatprep.subr.mxu0 0.0
        %926 = vmatpush1.msra.mxu0 %v452
        %927 = vmatprep.subr.mxu0 0.0
        %928 = vmatpush1.msra.mxu0 %v451
        %929 = vmatprep.subr.mxu0 0.0
        %930 = vmatpush1.msra.mxu0 %v450
        %931 = vmatprep.subr.mxu0 0.0
        %932 = vmatpush2.msra.mxu0 0.0
        %933 = vmatprep.subr.mxu0 0.0
        %934 = vmatpush2.msra.mxu0 0.0
        %935 = vmatprep.subr.mxu0 0.0
        %936 = vmatpush2.msra.mxu0 0.0
        %937 = vmatprep.subr.mxu0 0.0
        %938 = vmatpush2.msra.mxu0 0.0
        %939 = vmatprep.subr.mxu0 0.0
        %940 = vmatpush2.msra.mxu0 0.0
        %941 = vmatprep.subr.mxu0 0.0
        %942 = vmatpush2.msra.mxu0 0.0
        %943 = vmatprep.subr.mxu0 0.0
        %944 = vmatpush2.msra.mxu0 0.0
        %945 = vmatprep.subr.mxu0 0.0
        %946 = vmatpush2.msra.mxu0 0.0
        %947 = vmatprep.subr.mxu0 0.0
        %948 = vmatpush2.msra.mxu0 0.0
        %949 = vmatprep.subr.mxu0 0.0
        %950 = vmatpush2.msra.mxu0 0.0
        %951 = vmatprep.subr.mxu0 0.0
        %952 = vmatpush2.msra.mxu0 0.0
        %953 = vmatprep.subr.mxu0 0.0
        %954 = vmatpush2.msra.mxu0 0.0
        %955 = vmatprep.subr.mxu0 0.0
        %956 = vmatpush2.msra.mxu0 0.0
        %957 = vmatprep.subr.mxu0 0.0
        %958 = vmatpush2.msra.mxu0 0.0
        %959 = vmatprep.subr.mxu0 0.0
        %960 = vmatpush2.msra.mxu0 0.0
        %961 = vmatprep.subr.mxu0 0.0
        %962 = vmatpush2.msra.mxu0 0.0
        %963 = vmatprep.mubr.f32.mxu0 0.0
        %964 = vmatmul.mubr.f32.gmra.mxu0 %v897
        %v965 = vpop.f32.mrf.mxu0
        %v966 = vadd.f32 %v898, %v965
        %v967 = vpop.f32.mrf.mxu0
        %968 = vdwg.mxu0
        %v969 = vtanh.pop %v966
        %v970 = vld [vmem:[#allocation2 + $0x38] sm:$0xff]
        %971 = vmatprep.subr.mxu0 0.0
        %972 = vmatpush1.msra.mxu0 %v465
        %973 = vmatprep.subr.mxu0 0.0
        %974 = vmatpush1.msra.mxu0 %v464
        %975 = vmatprep.subr.mxu0 0.0
        %976 = vmatpush1.msra.mxu0 %v463
        %977 = vmatprep.subr.mxu0 0.0
        %978 = vmatpush1.msra.mxu0 %v462
        %979 = vmatprep.subr.mxu0 0.0
        %980 = vmatpush1.msra.mxu0 %v461
        %981 = vmatprep.subr.mxu0 0.0
        %982 = vmatpush1.msra.mxu0 %v460
        %983 = vmatprep.subr.mxu0 0.0
        %984 = vmatpush1.msra.mxu0 %v459
        %985 = vmatprep.subr.mxu0 0.0
        %986 = vmatpush1.msra.mxu0 %v458
        %987 = vmatprep.subr.mxu0 0.0
        %988 = vmatpush1.msra.mxu0 %v457
        %989 = vmatprep.subr.mxu0 0.0
        %990 = vmatpush1.msra.mxu0 %v456
        %991 = vmatprep.subr.mxu0 0.0
        %992 = vmatpush1.msra.mxu0 %v455
        %993 = vmatprep.subr.mxu0 0.0
        %994 = vmatpush1.msra.mxu0 %v454
        %995 = vmatprep.subr.mxu0 0.0
        %996 = vmatpush1.msra.mxu0 %v453
        %997 = vmatprep.subr.mxu0 0.0
        %998 = vmatpush1.msra.mxu0 %v452
        %999 = vmatprep.subr.mxu0 0.0
        %1000 = vmatpush1.msra.mxu0 %v451
        %1001 = vmatprep.subr.mxu0 0.0
        %1002 = vmatpush1.msra.mxu0 %v450
        %1003 = vmatprep.subr.mxu0 0.0
        %1004 = vmatpush2.msra.mxu0 0.0
        %1005 = vmatprep.subr.mxu0 0.0
        %1006 = vmatpush2.msra.mxu0 0.0
        %1007 = vmatprep.subr.mxu0 0.0
        %1008 = vmatpush2.msra.mxu0 0.0
        %1009 = vmatprep.subr.mxu0 0.0
        %1010 = vmatpush2.msra.mxu0 0.0
        %1011 = vmatprep.subr.mxu0 0.0
        %1012 = vmatpush2.msra.mxu0 0.0
        %1013 = vmatprep.subr.mxu0 0.0
        %1014 = vmatpush2.msra.mxu0 0.0
        %1015 = vmatprep.subr.mxu0 0.0
        %1016 = vmatpush2.msra.mxu0 0.0
        %1017 = vmatprep.subr.mxu0 0.0
        %1018 = vmatpush2.msra.mxu0 0.0
        %1019 = vmatprep.subr.mxu0 0.0
        %1020 = vmatpush2.msra.mxu0 0.0
        %1021 = vmatprep.subr.mxu0 0.0
        %1022 = vmatpush2.msra.mxu0 0.0
        %1023 = vmatprep.subr.mxu0 0.0
        %1024 = vmatpush2.msra.mxu0 0.0
        %1025 = vmatprep.subr.mxu0 0.0
        %1026 = vmatpush2.msra.mxu0 0.0
        %1027 = vmatprep.subr.mxu0 0.0
        %1028 = vmatpush2.msra.mxu0 0.0
        %1029 = vmatprep.subr.mxu0 0.0
        %1030 = vmatpush2.msra.mxu0 0.0
        %1031 = vmatprep.subr.mxu0 0.0
        %1032 = vmatpush2.msra.mxu0 0.0
        %1033 = vmatprep.subr.mxu0 0.0
        %1034 = vmatpush2.msra.mxu0 0.0
        %1035 = vmatprep.mubr.f32.mxu0 0.0
        %1036 = vmatmul.mubr.f32.gmra.mxu0 %v969
        %v1037 = vpop.f32.mrf.mxu0
        %v1038 = vadd.f32 %v970, %v1037
        %v1039 = vpop.f32.mrf.mxu0
        %1040 = vdwg.mxu0
        %v1041 = vtanh.pop %v1038
        %1042 = vst [vmem:[#allocation3] sm:$0xff] %v1041
        %p1043 = scmp.eq.s32.totalorder %s24, 1
        // Predicated region
        $region53: #{tpu_custom_call.1} parent=43 // pred_check
          %p1044 = pneg %p1043
        $region54: #{tpu_custom_call.1} parent=43 // pred_check_branch
          %1046 = sbr.rel (%p1044) target = $region56
        $region55: #{tpu_custom_call.1} parent=43 // pred_region
          %v1047 = vld [vmem:[#allocation4] sm:$0xff]
          %v1048 = vld [vmem:[#allocation4 + $0x8] sm:$0xff]
          %v1049 = vld [vmem:[#allocation4 + $0x10] sm:$0xff]
          %v1050 = vld [vmem:[#allocation4 + $0x18] sm:$0xff]
          %v1051 = vld [vmem:[#allocation4 + $0x20] sm:$0xff]
          %v1052 = vld [vmem:[#allocation4 + $0x28] sm:$0xff]
          %v1053 = vld [vmem:[#allocation4 + $0x30] sm:$0xff]
          %v1054 = vld [vmem:[#allocation4 + $0x38] sm:$0xff]
          %v1055 = vld [vmem:[#allocation4 + $0x40] sm:$0xff]
          %v1056 = vld [vmem:[#allocation4 + $0x48] sm:$0xff]
          %v1057 = vld [vmem:[#allocation4 + $0x50] sm:$0xff]
          %v1058 = vld [vmem:[#allocation4 + $0x58] sm:$0xff]
          %v1059 = vld [vmem:[#allocation4 + $0x60] sm:$0xff]
          %v1060 = vld [vmem:[#allocation4 + $0x68] sm:$0xff]
          %v1061 = vld [vmem:[#allocation4 + $0x70] sm:$0xff]
          %v1062 = vld [vmem:[#allocation4 + $0x78] sm:$0xff]
          %v1063 = vld [vmem:[%s5] sm:$0x1]
          %v1065 = vlaneseq
          %v1066 = vshrl.u32 %v1065, 7
          %v1067 = vsub.s32 0, %v1066
          %v1068 = vrot.slane %v1063, %v1067
          %1070 = vmatprep.subr.mxu0 0.0
          %1071 = vmatpush1.msra.mxu0 %v1062
          %1072 = vmatprep.subr.mxu0 0.0
          %1073 = vmatpush1.msra.mxu0 %v1061
          %1074 = vmatprep.subr.mxu0 0.0
          %1075 = vmatpush1.msra.mxu0 %v1060
          %1076 = vmatprep.subr.mxu0 0.0
          %1077 = vmatpush1.msra.mxu0 %v1059
          %1078 = vmatprep.subr.mxu0 0.0
          %1079 = vmatpush1.msra.mxu0 %v1058
          %1080 = vmatprep.subr.mxu0 0.0
          %1081 = vmatpush1.msra.mxu0 %v1057
          %1082 = vmatprep.subr.mxu0 0.0
          %1083 = vmatpush1.msra.mxu0 %v1056
          %1084 = vmatprep.subr.mxu0 0.0
          %1085 = vmatpush1.msra.mxu0 %v1055
          %1086 = vmatprep.subr.mxu0 0.0
          %1087 = vmatpush1.msra.mxu0 %v1054
          %1088 = vmatprep.subr.mxu0 0.0
          %1089 = vmatpush1.msra.mxu0 %v1053
          %1090 = vmatprep.subr.mxu0 0.0
          %1091 = vmatpush1.msra.mxu0 %v1052
          %1092 = vmatprep.subr.mxu0 0.0
          %1093 = vmatpush1.msra.mxu0 %v1051
          %1094 = vmatprep.subr.mxu0 0.0
          %1095 = vmatpush1.msra.mxu0 %v1050
          %1096 = vmatprep.subr.mxu0 0.0
          %1097 = vmatpush1.msra.mxu0 %v1049
          %1098 = vmatprep.subr.mxu0 0.0
          %1099 = vmatpush1.msra.mxu0 %v1048
          %1100 = vmatprep.subr.mxu0 0.0
          %1101 = vmatpush1.msra.mxu0 %v1047
          %1102 = vmatprep.subr.mxu0 0.0
          %1103 = vmatpush2.msra.mxu0 0.0
          %1104 = vmatprep.subr.mxu0 0.0
          %1105 = vmatpush2.msra.mxu0 0.0
          %1106 = vmatprep.subr.mxu0 0.0
          %1107 = vmatpush2.msra.mxu0 0.0
          %1108 = vmatprep.subr.mxu0 0.0
          %1109 = vmatpush2.msra.mxu0 0.0
          %1110 = vmatprep.subr.mxu0 0.0
          %1111 = vmatpush2.msra.mxu0 0.0
          %1112 = vmatprep.subr.mxu0 0.0
          %1113 = vmatpush2.msra.mxu0 0.0
          %1114 = vmatprep.subr.mxu0 0.0
          %1115 = vmatpush2.msra.mxu0 0.0
          %1116 = vmatprep.subr.mxu0 0.0
          %1117 = vmatpush2.msra.mxu0 0.0
          %1118 = vmatprep.subr.mxu0 0.0
          %1119 = vmatpush2.msra.mxu0 0.0
          %1120 = vmatprep.subr.mxu0 0.0
          %1121 = vmatpush2.msra.mxu0 0.0
          %1122 = vmatprep.subr.mxu0 0.0
          %1123 = vmatpush2.msra.mxu0 0.0
          %1124 = vmatprep.subr.mxu0 0.0
          %1125 = vmatpush2.msra.mxu0 0.0
          %1126 = vmatprep.subr.mxu0 0.0
          %1127 = vmatpush2.msra.mxu0 0.0
          %1128 = vmatprep.subr.mxu0 0.0
          %1129 = vmatpush2.msra.mxu0 0.0
          %1130 = vmatprep.subr.mxu0 0.0
          %1131 = vmatpush2.msra.mxu0 0.0
          %1132 = vmatprep.subr.mxu0 0.0
          %1133 = vmatpush2.msra.mxu0 0.0
          %1134 = vmatprep.mubr.f32.mxu0 0.0
          %1135 = vmatmul.mubr.f32.gmra.mxu0 %v1041
          %v1136 = vpop.f32.mrf.mxu0
          %v1137 = vadd.f32 %v1068, %v1136
          %v1138 = vpop.f32.mrf.mxu0
          %1139 = vdwg.mxu0
          %1140 = vmax.xlane.f32.xlu0 %v1137
          %v1141 = vpop.xlane.xlu0 %1140
          %v1142 = vsub.f32 %v1137, %v1141
          %v1143 = vmul.f32 %v1142, 1.442695
          %v1144 = vpow.pop %v1143
          %1145 = vadd.xlane.f32.xlu0 %v1144
          %v1146 = vpop.xlane.xlu0 %1145
          %v1147 = vlog2.pop %v1146
          %v1148 = vmul.f32 %v1147, 0.6931472
          %v1149 = vsub.f32 %v1142, %v1148
          %1150 = vst [vmem:[#allocation7] sm:$0xff] %v1149
        $region56: #{tpu_custom_call.1} parent=43 // pred_fallthru
          _
        // Predicated region
        $region57: #{tpu_custom_call.1} parent=43 // pred_check
          %p1151 = pneg %p182
        $region58: #{tpu_custom_call.1} parent=43 // pred_check_branch
          %1153 = sbr.rel (%p1151) target = $region60
        $region59: #{tpu_custom_call.1} parent=43 // pred_region
          %s1155 = ssub.s32 128, 128
          %1156 = vsyncadd [#allocation6], %s1155
          %s1157 = smul.addr %s23, 128
          %s1158 = scalar_lea.hbm %s6, %s1157
          %s1160 = sshll.u32 [#allocation7], 4
          %s1161 = int_to_ptr.vmem [resolvable:$true] %s1160
          %1163 = dma.vmem_to_hbm [thread:$0]  %s1161, 128, %s1158, [#allocation6]
        $region60: #{tpu_custom_call.1} parent=43 // pred_fallthru
          _
        // Predicated region
        $region61: #{tpu_custom_call.1} parent=43 // pred_check
          %p1164 = pneg %p182
        $region62: #{tpu_custom_call.1} parent=43 // pred_check_branch
          %1166 = sbr.rel (%p1164) target = $region64
        $region63: #{tpu_custom_call.1} parent=43 // pred_region
          %1167 = dma.done [#allocation6], 128
        $region64: #{tpu_custom_call.1} parent=43 // pred_fallthru
          _
      $region44: #{tpu_custom_call.1} parent=5 // pred_fallthru
        _
      %p1168 = scmp.le.s32.totalorder 2, %s14
      // Predicated region
      $region65: #{tpu_custom_call.1} parent=5 // pred_check
        %p1169 = pneg %p1168
      $region66: #{tpu_custom_call.1} parent=5 // pred_check_branch
        %1171 = sbr.rel (%p1169) target = $region68
      $region67: #{tpu_custom_call.1} parent=5 // pred_region
        %s1172 = ssub.s32 %s14, 2
      $region68: #{tpu_custom_call.1} parent=5 // pred_fallthru
        _
    $region6: #{tpu_custom_call.1} parent=1 // loop_footer
      %s18 = sadd.s32 1, %s14
    $region7: #{tpu_custom_call.1} parent=1 // loop_footer_branch
      %13 = sbr.rel target = $region3
    $region8: #{tpu_custom_call.1} parent=1 // loop_exit
      _
    %1173 = vsyncpa [#allocation5], 1
    %s1174 = scalar_lea.sflag [#allocation5], 1
    %1175 = vsyncpa %s1174, 1
    %1176 = vsyncpa [#allocation6], 1
    %s1177 = scalar_lea.sflag [#allocation6], 1
    %1178 = vsyncpa %s1177, 1

</llo_original>
